<compile_context>
chip_gen: v7x
topology: tpu7x:2x2x1
jax: 0.10.0
libtpu: 0.0.40
codegen_flags: <defaults>
</compile_context>

<pallas_src>
import math
import jax
import jax.numpy as jnp
from jax.experimental import pallas as pl
from jax.experimental.pallas import tpu as pltpu


# --------------------------- fused GNN-block kernel ---------------------------

def _gnn_block_kernel(alpha_ref, x_ref, mt_ref, bns_ref, bnb_ref,
                      sxw_ref, ssw_ref, bcast_ref, o_ref):
    """One grid step = `batch_tile` batch elements laid out as (TB*C, F) rows, F on lanes.
    Fuses: scattering matmul (all 3 scales) + eval-BN + PReLU + spectral attention +
    softmax + weighted mean over scales + skip.  Activation touches HBM once in/out."""
    F = x_ref.shape[1]
    a_scatter = alpha_ref[0]                       # ScatteringLayer PReLU slope
    a_att = alpha_ref[1]                           # SpectralAttention PReLU slope

    x = x_ref[...]                                 # (M, F)   M = TB*C rows
    mt = mt_ref[...]                               # (F, 3F)  [adj^T | H1^T | H2^T]

    # 1) All three scattering scales in one lane-dense MXU matmul: (M, F) @ (F, 3F).
    #    (f32 x f32 by default; bf16 operators opt-in via prepare_operators.)
    lhs = x.astype(mt.dtype) if mt.dtype != jnp.float32 else x
    s = jnp.dot(lhs, mt, preferred_element_type=jnp.float32)            # (M, 3F) f32

    # 2) Eval-mode BatchNorm1d + ScatteringLayer PReLU, all scales in one VPU pass.
    s = s * bns_ref[...] + bnb_ref[...]
    s = jnp.where(s > 0, s, a_scatter * s)

    # 3) Spectral-attention scores.  The per-batch-element reduction over the C channel
    #    rows is done as tiny matmuls with the attention weights folded into the
    #    selection matrices (full-vreg work, no per-scalar loops, no sublane masks).
    base = jnp.dot(sxw_ref[...], x, preferred_element_type=jnp.float32)   # (Bp, F)
    wsum = jnp.dot(ssw_ref[...], s, preferred_element_type=jnp.float32)   # (Bp, 3F)
    sc = jnp.concatenate([base, base, base], axis=1) + wsum               # (Bp, 3F)
    sc = jnp.where(sc > 0, sc, a_att * sc)         # SpectralAttention PReLU

    # 4) Softmax over the 3 scales (lane-aligned static slices of the 3F slab).
    s0 = sc[:, :F]
    s1 = sc[:, F:2 * F]
    s2 = sc[:, 2 * F:]
    m = jnp.maximum(jnp.maximum(s0, s1), s2)
    e0 = jnp.exp(s0 - m)
    e1 = jnp.exp(s1 - m)
    e2 = jnp.exp(s2 - m)
    inv = pl.reciprocal(e0 + e1 + e2, approx=True)                        # EUP, ~free
    att = jnp.concatenate([e0 * inv, e1 * inv, e2 * inv], axis=1)         # (Bp, 3F)

    # 5) Broadcast per-batch attention back onto the C rows of each batch element,
    #    weighted mean over scales, skip connection.
    att_rows = jnp.dot(bcast_ref[...], att, preferred_element_type=jnp.float32)  # (M, 3F)
    w = s * att_rows
    o_ref[...] = (w[:, :F] + w[:, F:2 * F] + w[:, 2 * F:]) * (1.0 / 3.0) + x


def conv_temporal_spectral_forward(x, ops):
    """x: (N, C, T, V) -> (N, C, T, V).  `ops` comes from prepare_operators(params, ...)."""
    N, C, T, V = x.shape
    F = T * V
    M = ops['bn_scale'].shape[0]                 # rows per grid step = batch_tile * C
    Bp = ops['sxw'].shape[0]                     # padded segment count (>= 8 sublanes)
    assert M % C == 0 and (N * C) % M == 0, "batch_tile must divide N"
    steps = (N * C) // M

    xg = x.reshape(N * C, F)                     # free reshape; F stays on the lane axis

    def resident(shape):
        # Grid-invariant operands (constant index_map) -> fetched once and kept in VMEM.
        # With a multi-step grid, single-buffer them so they are not double-buffered.
        idx = lambda i: (0, 0)
        if steps > 1:
            return pl.BlockSpec(shape, idx, pipeline_mode=pl.Buffered(1))
        return pl.BlockSpec(shape, idx)

    out = pl.pallas_call(
        _gnn_block_kernel,
        out_shape=jax.ShapeDtypeStruct((N * C, F), jnp.float32),
        grid=(steps,),
        in_specs=[
            pl.BlockSpec(memory_space=pltpu.MemorySpace.SMEM),   # [alpha_scatter, alpha_att]
            pl.BlockSpec((M, F), lambda i: (i, 0)),              # x rows (batched M dim)
            resident((F, 3 * F)),                                # stacked operators^T
            resident((M, 3 * F)),                                # folded BN scale
            resident((M, 3 * F)),                                # folded BN shift
            resident((Bp, M)),                                   # w_att[:C]  segment-reduce
            resident((Bp, M)),                                   # w_att[C:]  segment-reduce
            resident((M, Bp)),                                   # segment -> rows broadcast
        ],
        out_specs=pl.BlockSpec((M, F), lambda i: (i, 0)),
        compiler_params=pltpu.CompilerParams(
            dimension_semantics=("parallel",)),                  # multi-step -> both TCs on v7x
    )(ops['alphas'], xg, ops['mt'], ops['bn_scale'], ops['bn_shift'],
      ops['sxw'], ops['ssw'], ops['bcast'])

    return out.reshape(N, C, T, V)


# --------------- hoisted, parameter-only precompute (runs once) ---------------

def prepare_operators(params, C, F, batch_tile, operator_dtype=jnp.float32, eps=1e-5):
    """Everything that depends only on parameters: graph operators (scale 0 = raw adj,
    H1 = I - P, H2 = P - P^2), folded eval-mode BatchNorm, and the attention weights
    folded into tiny segment-reduce / broadcast matrices.

    batch_tile:     batch elements per grid step (use N at small N -> single grid step).
    operator_dtype: jnp.float32 (default, tracks the reference closely) or jnp.bfloat16
                    (~3x MXU throughput on bf16-native v5e/v6e + half the resident-mt
                    footprint; accurate only to ~1e-2 absolute tolerance).
    """
    hp = jax.lax.Precision.HIGHEST
    adj = params['adj'].astype(jnp.float32)
    # adj + adj.T*(adj.T>adj) - adj*(adj.T>adj)  ==  elementwise max, then ReLU.
    A = jnp.maximum(jnp.maximum(adj, adj.T), 0.0)
    I = jnp.eye(F, dtype=jnp.float32)
    P = 0.5 * (I + A / jnp.sum(A * A))            # matrix_norm(A)**2 == sum(A*A)
    H1 = I - P
    H2 = P - jnp.matmul(P, P, precision=hp)       # hoisted F x F matmul (runs once)
    # Scale 0 uses the RAW adj (exactly as the PyTorch forward does for out1).
    # Pre-transpose + concatenate so the in-kernel matmul x(M,F) @ mt(F,3F) emits all
    # three scales lane-dense:  mt[:, k*F + f] = M_k[f, :].
    mt = jnp.concatenate([adj.T, H1.T, H2.T], axis=1).astype(operator_dtype)   # (F, 3F)

    # Eval-mode BatchNorm1d folded to scale/shift.  BN feature index = f*C + c; re-laid
    # out as (C, F), concatenated over scales to (C, 3F), then tiled per batch element.
    scales, shifts = [], []
    for k in range(3):
        bn = params['bn_scatter'][k]
        sc = bn['g'] / jnp.sqrt(bn['rv'] + eps)
        sh = bn['b'] - bn['rm'] * sc
        scales.append(sc.reshape(F, C).T)
        shifts.append(sh.reshape(F, C).T)
    bn_scale = jnp.tile(jnp.concatenate(scales, axis=1), (batch_tile, 1))      # (M, 3F)
    bn_shift = jnp.tile(jnp.concatenate(shifts, axis=1), (batch_tile, 1))      # (M, 3F)

    # Attention weights folded into segment-reduce / broadcast matrices (replaces the
    # old pre-broadcast (C, F) w_x / w_s inputs).  Segments padded to >= 8 sublanes;
    # padded score rows are all-zero -> softmax 1/3 (finite) and their broadcast
    # columns are zero, so they never touch real outputs.
    M = batch_tile * C
    Bp = max(8, -(-batch_tile // 8) * 8)
    w = params['w_att'].astype(jnp.float32)                                    # (2C,)
    rows = jnp.arange(M)
    seg = rows // C
    ch = rows % C
    onehot = (jnp.arange(Bp)[:, None] == seg[None, :]).astype(jnp.float32)     # (Bp, M)
    sxw = onehot * w[ch][None, :]                  # score contribution of the input rows
    ssw = onehot * w[C + ch][None, :]              # score contribution of the scattering
    bcast = onehot.T                               # (M, Bp): segment -> its C rows

    alphas = jnp.concatenate([params['alpha_scatter'].reshape(1),
                              params['alpha_att'].reshape(1)]).astype(jnp.float32)
    return dict(mt=mt, bn_scale=bn_scale, bn_shift=bn_shift,
                sxw=sxw, ssw=ssw, bcast=bcast, alphas=alphas)


# --------------------------- pure-JAX reference ---------------------------

def reference_forward(x, params, eps=1e-5):
    """Direct transcription of the PyTorch ConvTemporalSpectral forward (eval mode)."""
    N, C, T, V = x.shape
    F = T * V
    hp = jax.lax.Precision.HIGHEST
    xg = x.reshape(N, C, F).transpose(0, 2, 1)                    # (N, F, C)
    adj = params['adj']
    A = jnp.maximum(jnp.maximum(adj, adj.T), 0.0)
    I = jnp.eye(F, dtype=jnp.float32)
    P = 0.5 * (I + A / jnp.sum(A * A))
    mats = [adj, I - P, P - jnp.matmul(P, P, precision=hp)]
    outs = []
    for s in range(3):
        o = jnp.einsum('ij,njc->nic', mats[s], xg, precision=hp)  # (N, F, C)
        bn = params['bn_scatter'][s]
        o = o.reshape(N, F * C)
        o = (o - bn['rm']) / jnp.sqrt(bn['rv'] + eps) * bn['g'] + bn['b']
        outs.append(o.reshape(N, F, C))
    scat = jnp.stack(outs, axis=1)                                # (N, 3, F, C)
    a_sc = params['alpha_scatter'][0]
    scat = jnp.where(scat > 0, scat, a_sc * scat)                 # squash PReLU
    cat = jnp.concatenate(
        [jnp.broadcast_to(xg[:, None], (N, 3, F, C)), scat], axis=3)
    sc = jnp.einsum('nsfk,k->nsf', cat, params['w_att'], precision=hp)
    a_at = params['alpha_att'][0]
    sc = jnp.where(sc > 0, sc, a_at * sc)                         # attention PReLU
    att = jax.nn.softmax(sc, axis=1)                              # (N, 3, F)
    out = jnp.mean(scat * att[..., None], axis=1) + xg            # (N, F, C)
    return out.transpose(0, 2, 1).reshape(N, C, T, V)


# ------------------------------ parameter init ------------------------------

def init_params(key, C, T, V):
    F = T * V
    ks = jax.random.split(key, 3)
    b_adj = 1.0 / math.sqrt(F)            # ScatteringLayer.reset
    b_att = 1.0 / math.sqrt(2 * C)        # SpectralAttention.reset
    b_z = 1.0 / math.sqrt(T)              # ConvTemporalSpectral.Z (unused in forward)

    def bn(n):
        return dict(g=jnp.ones((n,), jnp.float32), b=jnp.zeros((n,), jnp.float32),
                    rm=jnp.zeros((n,), jnp.float32), rv=jnp.ones((n,), jnp.float32))

    return dict(
        Z=jax.random.uniform(ks[0], (F, F), jnp.float32, -b_z, b_z),  # unused in forward
        adj=jax.random.uniform(ks[1], (F, F), jnp.float32, -b_adj, b_adj),
        bn_scatter=[bn(F * C) for _ in range(3)],
        alpha_scatter=jnp.full((1,), 0.25, jnp.float32),
        w_att=jax.random.uniform(ks[2], (2 * C,), jnp.float32, -b_att, b_att),
        alpha_att=jnp.full((1,), 0.25, jnp.float32),
    )


if __name__ == "__main__":
    N, C, T, V = 2, 4, 8, 16          # batch, in_channels, time_dim, joints_dim
    F = T * V                          # feat_dim = 128 (lane-aligned)
    key = jax.random.PRNGKey(0)
    kx, kp = jax.random.split(key)
    params = init_params(kp, C, T, V)
    x = jax.random.normal(kx, (N, C, T, V), dtype=jnp.float32)

    # Hoisted parameter-only precompute; whole batch in one grid step (batch_tile=N),
    # so the scattering matmul has M = N*C = 8 full sublane rows and zero step overhead.
    ops = prepare_operators(params, C, F, batch_tile=N)
    fwd = jax.jit(conv_temporal_spectral_forward)
    out = jax.block_until_ready(fwd(x, ops))

    assert out.shape == (N, C, T, V)
    assert bool(jnp.all(jnp.isfinite(out)))
    ref = reference_forward(x, params)
    assert bool(jnp.allclose(out, ref, rtol=1e-2, atol=1e-2)), \
        float(jnp.max(jnp.abs(out - ref)))
    print("KERNEL_OK")
</pallas_src>

<mosaic_0001>
module attributes {stable_mosaic.version = 11 : i64} {
  func.func @_gnn_block_kernel(%arg0: i32, %arg1: memref<2xf32, #tpu.memory_space<smem>>, %arg2: memref<8x128xf32, #tpu.memory_space<vmem>>, %arg3: memref<128x384xf32, #tpu.memory_space<vmem>>, %arg4: memref<8x384xf32, #tpu.memory_space<vmem>>, %arg5: memref<8x384xf32, #tpu.memory_space<vmem>>, %arg6: memref<8x8xf32, #tpu.memory_space<vmem>>, %arg7: memref<8x8xf32, #tpu.memory_space<vmem>>, %arg8: memref<8x8xf32, #tpu.memory_space<vmem>>, %arg9: memref<8x128xf32, #tpu.memory_space<vmem>>) attributes {dimension_semantics = [#tpu.dimension_semantics<parallel>], iteration_bounds = array<i64: 1>, scalar_prefetch = 0 : i64, scratch_operands = 0 : i64, tpu.core_type = #tpu.core_type<tc>, window_params = [{transform_indices = @transform_0, window_bounds = array<i64: 2>}, {transform_indices = @transform_1, window_bounds = array<i64: 8, 128>}, {pipeline_mode = #tpu.pipeline_mode<synchronous>, transform_indices = @transform_2, window_bounds = array<i64: 128, 384>}, {pipeline_mode = #tpu.pipeline_mode<synchronous>, transform_indices = @transform_3, window_bounds = array<i64: 8, 384>}, {pipeline_mode = #tpu.pipeline_mode<synchronous>, transform_indices = @transform_4, window_bounds = array<i64: 8, 384>}, {pipeline_mode = #tpu.pipeline_mode<synchronous>, transform_indices = @transform_5, window_bounds = array<i64: 8, 8>}, {pipeline_mode = #tpu.pipeline_mode<synchronous>, transform_indices = @transform_6, window_bounds = array<i64: 8, 8>}, {pipeline_mode = #tpu.pipeline_mode<synchronous>, transform_indices = @transform_7, window_bounds = array<i64: 8, 8>}, {transform_indices = @transform_8, window_bounds = array<i64: 8, 128>}]} {
    %c0 = arith.constant 0 : index
    %0 = memref.load %arg1[%c0] : memref<2xf32, #tpu.memory_space<smem>>
    %c1 = arith.constant 1 : index
    %1 = memref.load %arg1[%c1] : memref<2xf32, #tpu.memory_space<smem>>
    %c0_0 = arith.constant 0 : index
    %c0_1 = arith.constant 0 : index
    %2 = vector.load %arg2[%c0_0, %c0_1] : memref<8x128xf32, #tpu.memory_space<vmem>>, vector<8x128xf32>
    %c0_2 = arith.constant 0 : index
    %c0_3 = arith.constant 0 : index
    %3 = vector.load %arg3[%c0_2, %c0_3] : memref<128x384xf32, #tpu.memory_space<vmem>>, vector<128x384xf32>
    %cst = arith.constant dense<0.000000e+00> : vector<8x384xf32>
    %4 = tpu.matmul %2, %3, %cst {dimension_numbers = #tpu.dot_dimension_numbers<[1], [0], [0], [1], [0, 0, 1, 1], [], []>} : vector<8x128xf32>, vector<128x384xf32>, vector<8x384xf32> -> vector<8x384xf32>
    %c0_4 = arith.constant 0 : index
    %c0_5 = arith.constant 0 : index
    %5 = vector.load %arg4[%c0_4, %c0_5] : memref<8x384xf32, #tpu.memory_space<vmem>>, vector<8x384xf32>
    %6 = arith.mulf %4, %5 : vector<8x384xf32>
    %c0_6 = arith.constant 0 : index
    %c0_7 = arith.constant 0 : index
    %7 = vector.load %arg5[%c0_6, %c0_7] : memref<8x384xf32, #tpu.memory_space<vmem>>, vector<8x384xf32>
    %8 = arith.addf %6, %7 : vector<8x384xf32>
    %cst_8 = arith.constant 0.000000e+00 : f32
    %9 = vector.broadcast %cst_8 : f32 to vector<8x384xf32>
    %10 = arith.cmpf ogt, %8, %9 : vector<8x384xf32>
    %11 = vector.broadcast %0 : f32 to vector<8x384xf32>
    %12 = arith.mulf %11, %8 : vector<8x384xf32>
    %13 = arith.select %10, %8, %12 : vector<8x384xi1>, vector<8x384xf32>
    %c0_9 = arith.constant 0 : index
    %c0_10 = arith.constant 0 : index
    %14 = vector.load %arg6[%c0_9, %c0_10] : memref<8x8xf32, #tpu.memory_space<vmem>>, vector<8x8xf32>
    %cst_11 = arith.constant dense<0.000000e+00> : vector<8x128xf32>
    %15 = tpu.matmul %14, %2, %cst_11 {dimension_numbers = #tpu.dot_dimension_numbers<[1], [0], [0], [1], [0, 0, 1, 1], [], []>} : vector<8x8xf32>, vector<8x128xf32>, vector<8x128xf32> -> vector<8x128xf32>
    %c0_12 = arith.constant 0 : index
    %c0_13 = arith.constant 0 : index
    %16 = vector.load %arg7[%c0_12, %c0_13] : memref<8x8xf32, #tpu.memory_space<vmem>>, vector<8x8xf32>
    %cst_14 = arith.constant dense<0.000000e+00> : vector<8x384xf32>
    %17 = tpu.matmul %16, %13, %cst_14 {dimension_numbers = #tpu.dot_dimension_numbers<[1], [0], [0], [1], [0, 0, 1, 1], [], []>} : vector<8x8xf32>, vector<8x384xf32>, vector<8x384xf32> -> vector<8x384xf32>
    %18 = tpu.concatenate %15, %15, %15 in 1 : vector<8x128xf32>, vector<8x128xf32>, vector<8x128xf32> -> vector<8x384xf32>
    %19 = arith.addf %18, %17 : vector<8x384xf32>
    %cst_15 = arith.constant 0.000000e+00 : f32
    %20 = vector.broadcast %cst_15 : f32 to vector<8x384xf32>
    %21 = arith.cmpf ogt, %19, %20 : vector<8x384xf32>
    %22 = vector.broadcast %1 : f32 to vector<8x384xf32>
    %23 = arith.mulf %22, %19 : vector<8x384xf32>
    %24 = arith.select %21, %19, %23 : vector<8x384xi1>, vector<8x384xf32>
    %25 = vector.extract_strided_slice %24 {offsets = [0, 0], sizes = [8, 128], strides = [1, 1]} : vector<8x384xf32> to vector<8x128xf32>
    %26 = vector.extract_strided_slice %24 {offsets = [0, 128], sizes = [8, 128], strides = [1, 1]} : vector<8x384xf32> to vector<8x128xf32>
    %27 = vector.extract_strided_slice %24 {offsets = [0, 256], sizes = [8, 128], strides = [1, 1]} : vector<8x384xf32> to vector<8x128xf32>
    %28 = arith.maximumf %25, %26 : vector<8x128xf32>
    %29 = arith.maximumf %28, %27 : vector<8x128xf32>
    %30 = arith.subf %25, %29 : vector<8x128xf32>
    %31 = math.exp %30 : vector<8x128xf32>
    %32 = arith.subf %26, %29 : vector<8x128xf32>
    %33 = math.exp %32 : vector<8x128xf32>
    %34 = arith.subf %27, %29 : vector<8x128xf32>
    %35 = math.exp %34 : vector<8x128xf32>
    %36 = arith.addf %31, %33 : vector<8x128xf32>
    %37 = arith.addf %36, %35 : vector<8x128xf32>
    %38 = tpu.reciprocal %37 {approx = true} : vector<8x128xf32> -> vector<8x128xf32>
    %39 = arith.mulf %31, %38 : vector<8x128xf32>
    %40 = arith.mulf %33, %38 : vector<8x128xf32>
    %41 = arith.mulf %35, %38 : vector<8x128xf32>
    %42 = tpu.concatenate %39, %40, %41 in 1 : vector<8x128xf32>, vector<8x128xf32>, vector<8x128xf32> -> vector<8x384xf32>
    %c0_16 = arith.constant 0 : index
    %c0_17 = arith.constant 0 : index
    %43 = vector.load %arg8[%c0_16, %c0_17] : memref<8x8xf32, #tpu.memory_space<vmem>>, vector<8x8xf32>
    %cst_18 = arith.constant dense<0.000000e+00> : vector<8x384xf32>
    %44 = tpu.matmul %43, %42, %cst_18 {dimension_numbers = #tpu.dot_dimension_numbers<[1], [0], [0], [1], [0, 0, 1, 1], [], []>} : vector<8x8xf32>, vector<8x384xf32>, vector<8x384xf32> -> vector<8x384xf32>
    %45 = arith.mulf %13, %44 : vector<8x384xf32>
    %46 = vector.extract_strided_slice %45 {offsets = [0, 0], sizes = [8, 128], strides = [1, 1]} : vector<8x384xf32> to vector<8x128xf32>
    %47 = vector.extract_strided_slice %45 {offsets = [0, 128], sizes = [8, 128], strides = [1, 1]} : vector<8x384xf32> to vector<8x128xf32>
    %48 = arith.addf %46, %47 : vector<8x128xf32>
    %49 = vector.extract_strided_slice %45 {offsets = [0, 256], sizes = [8, 128], strides = [1, 1]} : vector<8x384xf32> to vector<8x128xf32>
    %50 = arith.addf %48, %49 : vector<8x128xf32>
    %cst_19 = arith.constant 0.333333343 : f32
    %51 = vector.broadcast %cst_19 : f32 to vector<8x128xf32>
    %52 = arith.mulf %50, %51 : vector<8x128xf32>
    %53 = arith.addf %52, %2 : vector<8x128xf32>
    %c0_20 = arith.constant 0 : index
    %c0_21 = arith.constant 0 : index
    %54 = vector.load %arg9[%c0_20, %c0_21] : memref<8x128xf32, #tpu.memory_space<vmem>>, vector<8x128xf32>
    tpu.vector_store %arg9[%c0_20, %c0_21], %53 {strides = array<i32>} : memref<8x128xf32, #tpu.memory_space<vmem>>, vector<8x128xf32>,
    return
  }
  func.func @transform_0(%arg0: i32) -> i32 {
    %c0_i32 = arith.constant 0 : i32
    %c0_i32_0 = arith.constant 0 : i32
    return %c0_i32 : i32
  }
  func.func @transform_1(%arg0: i32) -> (i32, i32) {
    %c0_i32 = arith.constant 0 : i32
    %c0_i32_0 = arith.constant 0 : i32
    return %arg0, %c0_i32 : i32, i32
  }
  func.func @transform_2(%arg0: i32) -> (i32, i32) {
    %c0_i32 = arith.constant 0 : i32
    %c0_i32_0 = arith.constant 0 : i32
    %c0_i32_1 = arith.constant 0 : i32
    return %c0_i32, %c0_i32_0 : i32, i32
  }
  func.func @transform_3(%arg0: i32) -> (i32, i32) {
    %c0_i32 = arith.constant 0 : i32
    %c0_i32_0 = arith.constant 0 : i32
    %c0_i32_1 = arith.constant 0 : i32
    return %c0_i32, %c0_i32_0 : i32, i32
  }
  func.func @transform_4(%arg0: i32) -> (i32, i32) {
    %c0_i32 = arith.constant 0 : i32
    %c0_i32_0 = arith.constant 0 : i32
    %c0_i32_1 = arith.constant 0 : i32
    return %c0_i32, %c0_i32_0 : i32, i32
  }
  func.func @transform_5(%arg0: i32) -> (i32, i32) {
    %c0_i32 = arith.constant 0 : i32
    %c0_i32_0 = arith.constant 0 : i32
    %c0_i32_1 = arith.constant 0 : i32
    return %c0_i32, %c0_i32_0 : i32, i32
  }
  func.func @transform_6(%arg0: i32) -> (i32, i32) {
    %c0_i32 = arith.constant 0 : i32
    %c0_i32_0 = arith.constant 0 : i32
    %c0_i32_1 = arith.constant 0 : i32
    return %c0_i32, %c0_i32_0 : i32, i32
  }
  func.func @transform_7(%arg0: i32) -> (i32, i32) {
    %c0_i32 = arith.constant 0 : i32
    %c0_i32_0 = arith.constant 0 : i32
    %c0_i32_1 = arith.constant 0 : i32
    return %c0_i32, %c0_i32_0 : i32, i32
  }
  func.func @transform_8(%arg0: i32) -> (i32, i32) {
    %c0_i32 = arith.constant 0 : i32
    %c0_i32_0 = arith.constant 0 : i32
    return %arg0, %c0_i32 : i32, i32
  }
}

</mosaic_0001>

<llo_original>
// kernel: conv_temporal_spectral_forward.1
$region0: #{conv_temporal_spectral_forward.1}
  #allocation0 [shape = 'u32[]', space=smem, size = 0x4, offset = 0x4, fixed_abs, tag = 'smem constant byte address 0x4 - core index']
  #allocation1 [shape = 'u32[144,128]{1,0:T(1,128)}', space=vmem, size = 0x12000, scoped, tag = 'internal scratch']
  %s0 = inlined_call_operand.vmem [shape: f32[2], index: 0, kind: input, shape index: {}]
  %s1 = inlined_call_operand.vmem [shape: f32[8,128], index: 1, kind: input, shape index: {}]
  %s2 = inlined_call_operand.hbm [shape: f32[128,384], index: 2, kind: input, shape index: {}]
  %s3 = inlined_call_operand.vmem [shape: f32[8,384], index: 3, kind: input, shape index: {}]
  %s4 = inlined_call_operand.vmem [shape: f32[8,384], index: 4, kind: input, shape index: {}]
  %s5 = inlined_call_operand.vmem [shape: f32[8,8], index: 5, kind: input, shape index: {}]
  %s6 = inlined_call_operand.vmem [shape: f32[8,8], index: 6, kind: input, shape index: {}]
  %s7 = inlined_call_operand.vmem [shape: f32[8,8], index: 7, kind: input, shape index: {}]
  %s8 = inlined_call_operand.vmem [shape: f32[8,128], index: 8, kind: output, shape index: {}]
  %s9 = sld [smem:[#allocation0]]
  $region50: #{conv_temporal_spectral_forward.1} parent=0
    _
  %s11 = ssub.s32 1, %s9
  %s12 = scalar_select 0, %s11, %s9
  $region1: #{conv_temporal_spectral_forward.1} parent=0
    #allocation2 [shape = 'u8[512]{0}', space=smem, size = 0x200, scoped, tag = 'input window, operand 0, single buffered']
    #allocation3 [shape = 's32[1]{0}', space=sflag, size = 0x4, scoped, tag = 'scoped memory for conv_temporal_spectral_forward.1']
    #allocation4 [shape = 's32[1]{0}', space=sflag, size = 0x4, scoped, tag = 'scoped memory for conv_temporal_spectral_forward.1']
    #allocation5 [shape = 'u8[196608]{0}', space=vmem, size = 0x30000, scoped, tag = 'input window, operand 2, single buffered']
    %13 = vsyncpa [#allocation4], 0
    %14 = vsyncpa [#allocation3], 0
    // Predicated region
    $region2: #{conv_temporal_spectral_forward.1} parent=1 // pred_check
      _
    $region3: #{conv_temporal_spectral_forward.1} parent=1 // pred_check_branch
      %16 = sbr.rel (0) target = $region5
    $region4: #{conv_temporal_spectral_forward.1} parent=1 // pred_region
      %s18 = ssub.s32 16, 16
      %19 = vsyncadd [#allocation4], %s18
      %s21 = sshll.u32 %s0, 4
      %s22 = int_to_ptr.vmem [resolvable:$true] %s21
      %24 = dma.vmem_to_smem %s22, 16, [#allocation2], [#allocation4]
    $region5: #{conv_temporal_spectral_forward.1} parent=1 // pred_fallthru
      _
    // Predicated region
    $region6: #{conv_temporal_spectral_forward.1} parent=1 // pred_check
      _
    $region7: #{conv_temporal_spectral_forward.1} parent=1 // pred_check_branch
      %26 = sbr.rel (0) target = $region9
    $region8: #{conv_temporal_spectral_forward.1} parent=1 // pred_region
      _
    $region9: #{conv_temporal_spectral_forward.1} parent=1 // pred_fallthru
      _
    // Predicated region
    $region10: #{conv_temporal_spectral_forward.1} parent=1 // pred_check
      _
    $region11: #{conv_temporal_spectral_forward.1} parent=1 // pred_check_branch
      %28 = sbr.rel (0) target = $region13
    $region12: #{conv_temporal_spectral_forward.1} parent=1 // pred_region
      %s30 = ssub.s32 6144, 6144
      %31 = vsyncadd [#allocation3], %s30
      %s32 = sshll.u32 [#allocation5], 4
      %s33 = int_to_ptr.vmem [resolvable:$true] %s32
      %38 = dma.hbm_to_vmem [thread:$0]  %s2, 6144, %s33, [#allocation3], 384, 384, 24
    $region13: #{conv_temporal_spectral_forward.1} parent=1 // pred_fallthru
      _
    // Predicated region
    $region14: #{conv_temporal_spectral_forward.1} parent=1 // pred_check
      _
    $region15: #{conv_temporal_spectral_forward.1} parent=1 // pred_check_branch
      %40 = sbr.rel (0) target = $region17
    $region16: #{conv_temporal_spectral_forward.1} parent=1 // pred_region
      _
    $region17: #{conv_temporal_spectral_forward.1} parent=1 // pred_fallthru
      _
    // Predicated region
    $region18: #{conv_temporal_spectral_forward.1} parent=1 // pred_check
      _
    $region19: #{conv_temporal_spectral_forward.1} parent=1 // pred_check_branch
      %42 = sbr.rel (0) target = $region21
    $region20: #{conv_temporal_spectral_forward.1} parent=1 // pred_region
      _
    $region21: #{conv_temporal_spectral_forward.1} parent=1 // pred_fallthru
      _
    // Predicated region
    $region22: #{conv_temporal_spectral_forward.1} parent=1 // pred_check
      _
    $region23: #{conv_temporal_spectral_forward.1} parent=1 // pred_check_branch
      %44 = sbr.rel (0) target = $region25
    $region24: #{conv_temporal_spectral_forward.1} parent=1 // pred_region
      _
    $region25: #{conv_temporal_spectral_forward.1} parent=1 // pred_fallthru
      _
    // Predicated region
    $region26: #{conv_temporal_spectral_forward.1} parent=1 // pred_check
      _
    $region27: #{conv_temporal_spectral_forward.1} parent=1 // pred_check_branch
      %46 = sbr.rel (0) target = $region29
    $region28: #{conv_temporal_spectral_forward.1} parent=1 // pred_region
      _
    $region29: #{conv_temporal_spectral_forward.1} parent=1 // pred_fallthru
      _
    // Predicated region
    $region30: #{conv_temporal_spectral_forward.1} parent=1 // pred_check
      _
    $region31: #{conv_temporal_spectral_forward.1} parent=1 // pred_check_branch
      %48 = sbr.rel (0) target = $region33
    $region32: #{conv_temporal_spectral_forward.1} parent=1 // pred_region
      _
    $region33: #{conv_temporal_spectral_forward.1} parent=1 // pred_fallthru
      _
    // Predicated region
    $region34: #{conv_temporal_spectral_forward.1} parent=1 // pred_check
      _
    $region35: #{conv_temporal_spectral_forward.1} parent=1 // pred_check_branch
      %50 = sbr.rel (0) target = $region37
    $region36: #{conv_temporal_spectral_forward.1} parent=1 // pred_region
      %51 = dma.done [#allocation4], 16
    $region37: #{conv_temporal_spectral_forward.1} parent=1 // pred_fallthru
      _
    // Predicated region
    $region38: #{conv_temporal_spectral_forward.1} parent=1 // pred_check
      _
    $region39: #{conv_temporal_spectral_forward.1} parent=1 // pred_check_branch
      %53 = sbr.rel (0) target = $region41
    $region40: #{conv_temporal_spectral_forward.1} parent=1 // pred_region
      %54 = dma.done [#allocation3], 6144
    $region41: #{conv_temporal_spectral_forward.1} parent=1 // pred_fallthru
      _
    %55 = sfence
    %s56 = sld [smem:[#allocation2]]
    %s57 = sld [smem:[#allocation2 + $0x1]]
    %v58 = vld [vmem:[%s1] sm:$0xff]
    %v59 = vld [vmem:[#allocation5] sm:$0xff]
    %v60 = vld [vmem:[#allocation5 + $0x8] sm:$0xff]
    %v61 = vld [vmem:[#allocation5 + $0x10] sm:$0xff]
    %v62 = vld [vmem:[#allocation5 + $0x18] sm:$0xff]
    %v63 = vld [vmem:[#allocation5 + $0x20] sm:$0xff]
    %v64 = vld [vmem:[#allocation5 + $0x28] sm:$0xff]
    %v65 = vld [vmem:[#allocation5 + $0x30] sm:$0xff]
    %v66 = vld [vmem:[#allocation5 + $0x38] sm:$0xff]
    %v67 = vld [vmem:[#allocation5 + $0x40] sm:$0xff]
    %v68 = vld [vmem:[#allocation5 + $0x48] sm:$0xff]
    %v69 = vld [vmem:[#allocation5 + $0x50] sm:$0xff]
    %v70 = vld [vmem:[#allocation5 + $0x58] sm:$0xff]
    %v71 = vld [vmem:[#allocation5 + $0x60] sm:$0xff]
    %v72 = vld [vmem:[#allocation5 + $0x68] sm:$0xff]
    %v73 = vld [vmem:[#allocation5 + $0x70] sm:$0xff]
    %v74 = vld [vmem:[#allocation5 + $0x78] sm:$0xff]
    %v75 = vld [vmem:[#allocation5 + $0x80] sm:$0xff]
    %v76 = vld [vmem:[#allocation5 + $0x88] sm:$0xff]
    %v77 = vld [vmem:[#allocation5 + $0x90] sm:$0xff]
    %v78 = vld [vmem:[#allocation5 + $0x98] sm:$0xff]
    %v79 = vld [vmem:[#allocation5 + $0xa0] sm:$0xff]
    %v80 = vld [vmem:[#allocation5 + $0xa8] sm:$0xff]
    %v81 = vld [vmem:[#allocation5 + $0xb0] sm:$0xff]
    %v82 = vld [vmem:[#allocation5 + $0xb8] sm:$0xff]
    %v83 = vld [vmem:[#allocation5 + $0xc0] sm:$0xff]
    %v84 = vld [vmem:[#allocation5 + $0xc8] sm:$0xff]
    %v85 = vld [vmem:[#allocation5 + $0xd0] sm:$0xff]
    %v86 = vld [vmem:[#allocation5 + $0xd8] sm:$0xff]
    %v87 = vld [vmem:[#allocation5 + $0xe0] sm:$0xff]
    %v88 = vld [vmem:[#allocation5 + $0xe8] sm:$0xff]
    %v89 = vld [vmem:[#allocation5 + $0xf0] sm:$0xff]
    %v90 = vld [vmem:[#allocation5 + $0xf8] sm:$0xff]
    %v91 = vld [vmem:[#allocation5 + $0x100] sm:$0xff]
    %v92 = vld [vmem:[#allocation5 + $0x108] sm:$0xff]
    %v93 = vld [vmem:[#allocation5 + $0x110] sm:$0xff]
    %v94 = vld [vmem:[#allocation5 + $0x118] sm:$0xff]
    %v95 = vld [vmem:[#allocation5 + $0x120] sm:$0xff]
    %v96 = vld [vmem:[#allocation5 + $0x128] sm:$0xff]
    %v97 = vld [vmem:[#allocation5 + $0x130] sm:$0xff]
    %v98 = vld [vmem:[#allocation5 + $0x138] sm:$0xff]
    %v99 = vld [vmem:[#allocation5 + $0x140] sm:$0xff]
    %v100 = vld [vmem:[#allocation5 + $0x148] sm:$0xff]
    %v101 = vld [vmem:[#allocation5 + $0x150] sm:$0xff]
    %v102 = vld [vmem:[#allocation5 + $0x158] sm:$0xff]
    %v103 = vld [vmem:[#allocation5 + $0x160] sm:$0xff]
    %v104 = vld [vmem:[#allocation5 + $0x168] sm:$0xff]
    %v105 = vld [vmem:[#allocation5 + $0x170] sm:$0xff]
    %v106 = vld [vmem:[#allocation5 + $0x178] sm:$0xff]
    %107 = vmatprep.subr.mxu0 %v60
    %108 = vmatpush1.msra.mxu0 %v59
    %109 = vmatprep.subr.mxu0 %v63
    %110 = vmatpush1.msra.mxu0 %v62
    %111 = vmatprep.subr.mxu0 %v66
    %112 = vmatpush1.msra.mxu0 %v65
    %113 = vmatprep.subr.mxu0 %v69
    %114 = vmatpush1.msra.mxu0 %v68
    %115 = vmatprep.subr.mxu0 %v72
    %116 = vmatpush1.msra.mxu0 %v71
    %117 = vmatprep.subr.mxu0 %v75
    %118 = vmatpush1.msra.mxu0 %v74
    %119 = vmatprep.subr.mxu0 %v78
    %120 = vmatpush1.msra.mxu0 %v77
    %121 = vmatprep.subr.mxu0 %v81
    %122 = vmatpush1.msra.mxu0 %v80
    %123 = vmatprep.subr.mxu0 %v84
    %124 = vmatpush1.msra.mxu0 %v83
    %125 = vmatprep.subr.mxu0 %v87
    %126 = vmatpush1.msra.mxu0 %v86
    %127 = vmatprep.subr.mxu0 %v90
    %128 = vmatpush1.msra.mxu0 %v89
    %129 = vmatprep.subr.mxu0 %v93
    %130 = vmatpush1.msra.mxu0 %v92
    %131 = vmatprep.subr.mxu0 %v96
    %132 = vmatpush1.msra.mxu0 %v95
    %133 = vmatprep.subr.mxu0 %v99
    %134 = vmatpush1.msra.mxu0 %v98
    %135 = vmatprep.subr.mxu0 %v102
    %136 = vmatpush1.msra.mxu0 %v101
    %137 = vmatprep.subr.mxu0 %v105
    %138 = vmatpush1.msra.mxu0 %v104
    %139 = vmatprep.subr.mxu0 0.0
    %140 = vmatpush1.msra.mxu0 0.0
    %141 = vmatprep.subr.mxu0 0.0
    %142 = vmatpush1.msra.mxu0 0.0
    %143 = vmatprep.subr.mxu0 0.0
    %144 = vmatpush1.msra.mxu0 0.0
    %145 = vmatprep.subr.mxu0 0.0
    %146 = vmatpush1.msra.mxu0 0.0
    %147 = vmatprep.subr.mxu0 0.0
    %148 = vmatpush1.msra.mxu0 0.0
    %149 = vmatprep.subr.mxu0 0.0
    %150 = vmatpush1.msra.mxu0 0.0
    %151 = vmatprep.subr.mxu0 0.0
    %152 = vmatpush1.msra.mxu0 0.0
    %153 = vmatprep.subr.mxu0 0.0
    %154 = vmatpush1.msra.mxu0 0.0
    %155 = vmatprep.subr.mxu0 0.0
    %156 = vmatpush1.msra.mxu0 0.0
    %157 = vmatprep.subr.mxu0 0.0
    %158 = vmatpush1.msra.mxu0 0.0
    %159 = vmatprep.subr.mxu0 0.0
    %160 = vmatpush1.msra.mxu0 0.0
    %161 = vmatprep.subr.mxu0 0.0
    %162 = vmatpush1.msra.mxu0 0.0
    %163 = vmatprep.subr.mxu0 0.0
    %164 = vmatpush1.msra.mxu0 0.0
    %165 = vmatprep.subr.mxu0 0.0
    %166 = vmatpush1.msra.mxu0 0.0
    %167 = vmatprep.subr.mxu0 0.0
    %168 = vmatpush1.msra.mxu0 0.0
    %169 = vmatprep.subr.mxu0 0.0
    %170 = vmatpush1.msra.mxu0 0.0
    %171 = vmatprep.mubr.f32.mxu0 0.0
    %172 = vmatmul.mubr.f32.gmra.mrb[0].mxu0 %v58
    %v173 = vpop.f32.mrb[0].mxu0
    %v174 = vadd.f32 0.0, %v173
    %v175 = vpop.f32.mrb[0].mxu0
    %v176 = vadd.f32 0.0, %v175
    %177 = vdwg.mxu0
    %178 = vmatprep.subr.mxu0 0.0
    %179 = vmatpush1.msra.mxu0 %v61
    %180 = vmatprep.subr.mxu0 0.0
    %181 = vmatpush1.msra.mxu0 %v64
    %182 = vmatprep.subr.mxu0 0.0
    %183 = vmatpush1.msra.mxu0 %v67
    %184 = vmatprep.subr.mxu0 0.0
    %185 = vmatpush1.msra.mxu0 %v70
    %186 = vmatprep.subr.mxu0 0.0
    %187 = vmatpush1.msra.mxu0 %v73
    %188 = vmatprep.subr.mxu0 0.0
    %189 = vmatpush1.msra.mxu0 %v76
    %190 = vmatprep.subr.mxu0 0.0
    %191 = vmatpush1.msra.mxu0 %v79
    %192 = vmatprep.subr.mxu0 0.0
    %193 = vmatpush1.msra.mxu0 %v82
    %194 = vmatprep.subr.mxu0 0.0
    %195 = vmatpush1.msra.mxu0 %v85
    %196 = vmatprep.subr.mxu0 0.0
    %197 = vmatpush1.msra.mxu0 %v88
    %198 = vmatprep.subr.mxu0 0.0
    %199 = vmatpush1.msra.mxu0 %v91
    %200 = vmatprep.subr.mxu0 0.0
    %201 = vmatpush1.msra.mxu0 %v94
    %202 = vmatprep.subr.mxu0 0.0
    %203 = vmatpush1.msra.mxu0 %v97
    %204 = vmatprep.subr.mxu0 0.0
    %205 = vmatpush1.msra.mxu0 %v100
    %206 = vmatprep.subr.mxu0 0.0
    %207 = vmatpush1.msra.mxu0 %v103
    %208 = vmatprep.subr.mxu0 0.0
    %209 = vmatpush1.msra.mxu0 %v106
    %210 = vmatprep.subr.mxu0 0.0
    %211 = vmatpush1.msra.mxu0 0.0
    %212 = vmatprep.subr.mxu0 0.0
    %213 = vmatpush1.msra.mxu0 0.0
    %214 = vmatprep.subr.mxu0 0.0
    %215 = vmatpush1.msra.mxu0 0.0
    %216 = vmatprep.subr.mxu0 0.0
    %217 = vmatpush1.msra.mxu0 0.0
    %218 = vmatprep.subr.mxu0 0.0
    %219 = vmatpush1.msra.mxu0 0.0
    %220 = vmatprep.subr.mxu0 0.0
    %221 = vmatpush1.msra.mxu0 0.0
    %222 = vmatprep.subr.mxu0 0.0
    %223 = vmatpush1.msra.mxu0 0.0
    %224 = vmatprep.subr.mxu0 0.0
    %225 = vmatpush1.msra.mxu0 0.0
    %226 = vmatprep.subr.mxu0 0.0
    %227 = vmatpush1.msra.mxu0 0.0
    %228 = vmatprep.subr.mxu0 0.0
    %229 = vmatpush1.msra.mxu0 0.0
    %230 = vmatprep.subr.mxu0 0.0
    %231 = vmatpush1.msra.mxu0 0.0
    %232 = vmatprep.subr.mxu0 0.0
    %233 = vmatpush1.msra.mxu0 0.0
    %234 = vmatprep.subr.mxu0 0.0
    %235 = vmatpush1.msra.mxu0 0.0
    %236 = vmatprep.subr.mxu0 0.0
    %237 = vmatpush1.msra.mxu0 0.0
    %238 = vmatprep.subr.mxu0 0.0
    %239 = vmatpush1.msra.mxu0 0.0
    %240 = vmatprep.subr.mxu0 0.0
    %241 = vmatpush1.msra.mxu0 0.0
    %242 = vmatprep.mubr.f32.mxu0 0.0
    %243 = vmatmul.mubr.f32.gmra.mrb[0].mxu0 %v58
    %v244 = vpop.f32.mrb[0].mxu0
    %v245 = vadd.f32 0.0, %v244
    %v246 = vpop.f32.mrb[0].mxu0
    %247 = vdwg.mxu0
    %v248 = vld [vmem:[%s3] sm:$0xff]
    %v249 = vld [vmem:[%s3 + $0x8] sm:$0xff]
    %v250 = vld [vmem:[%s3 + $0x10] sm:$0xff]
    %v251 = vmul.f32 %v174, %v248
    %v252 = vmul.f32 %v176, %v249
    %v253 = vmul.f32 %v245, %v250
    %v254 = vld [vmem:[%s4] sm:$0xff]
    %v255 = vld [vmem:[%s4 + $0x8] sm:$0xff]
    %v256 = vld [vmem:[%s4 + $0x10] sm:$0xff]
    %v257 = vadd.f32 %v251, %v254
    %v258 = vadd.f32 %v252, %v255
    %v259 = vadd.f32 %v253, %v256
    %vm260 = vcmp.gt.f32.partialorder %v257, 0.0
    %vm261 = vcmp.gt.f32.partialorder %v258, 0.0
    %vm262 = vcmp.gt.f32.partialorder %v259, 0.0
    %v263 = vstv %s56
    %v264 = vmul.f32 %v263, %v257
    %v265 = vmul.f32 %v263, %v258
    %v266 = vmul.f32 %v263, %v259
    %v267 = vsel %vm260, %v257, %v264
    %v268 = vsel %vm261, %v258, %v265
    %v269 = vsel %vm262, %v259, %v266
    %v270 = vld [vmem:[%s5] sm:$0xff]
    %vm271 = vcmask 64512
    %v273 = vsel %vm271, %v270, 0
    %275 = vmatprep.subr.mxu0 0.0
    %276 = vmatpush1.msra.mxu0 %v58
    %277 = vmatprep.subr.mxu0 0.0
    %278 = vmatpush1.msra.mxu0 0.0
    %279 = vmatprep.subr.mxu0 0.0
    %280 = vmatpush1.msra.mxu0 0.0
    %281 = vmatprep.subr.mxu0 0.0
    %282 = vmatpush1.msra.mxu0 0.0
    %283 = vmatprep.subr.mxu0 0.0
    %284 = vmatpush1.msra.mxu0 0.0
    %285 = vmatprep.subr.mxu0 0.0
    %286 = vmatpush1.msra.mxu0 0.0
    %287 = vmatprep.subr.mxu0 0.0
    %288 = vmatpush1.msra.mxu0 0.0
    %289 = vmatprep.subr.mxu0 0.0
    %290 = vmatpush1.msra.mxu0 0.0
    %291 = vmatprep.subr.mxu0 0.0
    %292 = vmatpush1.msra.mxu0 0.0
    %293 = vmatprep.subr.mxu0 0.0
    %294 = vmatpush1.msra.mxu0 0.0
    %295 = vmatprep.subr.mxu0 0.0
    %296 = vmatpush1.msra.mxu0 0.0
    %297 = vmatprep.subr.mxu0 0.0
    %298 = vmatpush1.msra.mxu0 0.0
    %299 = vmatprep.subr.mxu0 0.0
    %300 = vmatpush1.msra.mxu0 0.0
    %301 = vmatprep.subr.mxu0 0.0
    %302 = vmatpush1.msra.mxu0 0.0
    %303 = vmatprep.subr.mxu0 0.0
    %304 = vmatpush1.msra.mxu0 0.0
    %305 = vmatprep.subr.mxu0 0.0
    %306 = vmatpush1.msra.mxu0 0.0
    %307 = vmatprep.subr.mxu0 0.0
    %308 = vmatpush1.msra.mxu0 0.0
    %309 = vmatprep.subr.mxu0 0.0
    %310 = vmatpush1.msra.mxu0 0.0
    %311 = vmatprep.subr.mxu0 0.0
    %312 = vmatpush1.msra.mxu0 0.0
    %313 = vmatprep.subr.mxu0 0.0
    %314 = vmatpush1.msra.mxu0 0.0
    %315 = vmatprep.subr.mxu0 0.0
    %316 = vmatpush1.msra.mxu0 0.0
    %317 = vmatprep.subr.mxu0 0.0
    %318 = vmatpush1.msra.mxu0 0.0
    %319 = vmatprep.subr.mxu0 0.0
    %320 = vmatpush1.msra.mxu0 0.0
    %321 = vmatprep.subr.mxu0 0.0
    %322 = vmatpush1.msra.mxu0 0.0
    %323 = vmatprep.subr.mxu0 0.0
    %324 = vmatpush1.msra.mxu0 0.0
    %325 = vmatprep.subr.mxu0 0.0
    %326 = vmatpush1.msra.mxu0 0.0
    %327 = vmatprep.subr.mxu0 0.0
    %328 = vmatpush1.msra.mxu0 0.0
    %329 = vmatprep.subr.mxu0 0.0
    %330 = vmatpush1.msra.mxu0 0.0
    %331 = vmatprep.subr.mxu0 0.0
    %332 = vmatpush1.msra.mxu0 0.0
    %333 = vmatprep.subr.mxu0 0.0
    %334 = vmatpush1.msra.mxu0 0.0
    %335 = vmatprep.subr.mxu0 0.0
    %336 = vmatpush1.msra.mxu0 0.0
    %337 = vmatprep.subr.mxu0 0.0
    %338 = vmatpush1.msra.mxu0 0.0
    %339 = vmatprep.mubr.f32.mxu0 0.0
    %340 = vmatmul.mubr.f32.gmra.mrb[0].mxu0 %v273
    %v341 = vpop.f32.mrb[0].mxu0
    %v342 = vadd.f32 0.0, %v341
    %v343 = vpop.f32.mrb[0].mxu0
    %344 = vdwg.mxu0
    %v345 = vld [vmem:[%s6] sm:$0xff]
    %v347 = vsel %vm271, %v345, 0
    %349 = vmatprep.subr.mxu0 %v268
    %350 = vmatpush1.msra.mxu0 %v267
    %351 = vmatprep.subr.mxu0 0.0
    %352 = vmatpush1.msra.mxu0 0.0
    %353 = vmatprep.subr.mxu0 0.0
    %354 = vmatpush1.msra.mxu0 0.0
    %355 = vmatprep.subr.mxu0 0.0
    %356 = vmatpush1.msra.mxu0 0.0
    %357 = vmatprep.subr.mxu0 0.0
    %358 = vmatpush1.msra.mxu0 0.0
    %359 = vmatprep.subr.mxu0 0.0
    %360 = vmatpush1.msra.mxu0 0.0
    %361 = vmatprep.subr.mxu0 0.0
    %362 = vmatpush1.msra.mxu0 0.0
    %363 = vmatprep.subr.mxu0 0.0
    %364 = vmatpush1.msra.mxu0 0.0
    %365 = vmatprep.subr.mxu0 0.0
    %366 = vmatpush1.msra.mxu0 0.0
    %367 = vmatprep.subr.mxu0 0.0
    %368 = vmatpush1.msra.mxu0 0.0
    %369 = vmatprep.subr.mxu0 0.0
    %370 = vmatpush1.msra.mxu0 0.0
    %371 = vmatprep.subr.mxu0 0.0
    %372 = vmatpush1.msra.mxu0 0.0
    %373 = vmatprep.subr.mxu0 0.0
    %374 = vmatpush1.msra.mxu0 0.0
    %375 = vmatprep.subr.mxu0 0.0
    %376 = vmatpush1.msra.mxu0 0.0
    %377 = vmatprep.subr.mxu0 0.0
    %378 = vmatpush1.msra.mxu0 0.0
    %379 = vmatprep.subr.mxu0 0.0
    %380 = vmatpush1.msra.mxu0 0.0
    %381 = vmatprep.subr.mxu0 0.0
    %382 = vmatpush1.msra.mxu0 0.0
    %383 = vmatprep.subr.mxu0 0.0
    %384 = vmatpush1.msra.mxu0 0.0
    %385 = vmatprep.subr.mxu0 0.0
    %386 = vmatpush1.msra.mxu0 0.0
    %387 = vmatprep.subr.mxu0 0.0
    %388 = vmatpush1.msra.mxu0 0.0
    %389 = vmatprep.subr.mxu0 0.0
    %390 = vmatpush1.msra.mxu0 0.0
    %391 = vmatprep.subr.mxu0 0.0
    %392 = vmatpush1.msra.mxu0 0.0
    %393 = vmatprep.subr.mxu0 0.0
    %394 = vmatpush1.msra.mxu0 0.0
    %395 = vmatprep.subr.mxu0 0.0
    %396 = vmatpush1.msra.mxu0 0.0
    %397 = vmatprep.subr.mxu0 0.0
    %398 = vmatpush1.msra.mxu0 0.0
    %399 = vmatprep.subr.mxu0 0.0
    %400 = vmatpush1.msra.mxu0 0.0
    %401 = vmatprep.subr.mxu0 0.0
    %402 = vmatpush1.msra.mxu0 0.0
    %403 = vmatprep.subr.mxu0 0.0
    %404 = vmatpush1.msra.mxu0 0.0
    %405 = vmatprep.subr.mxu0 0.0
    %406 = vmatpush1.msra.mxu0 0.0
    %407 = vmatprep.subr.mxu0 0.0
    %408 = vmatpush1.msra.mxu0 0.0
    %409 = vmatprep.subr.mxu0 0.0
    %410 = vmatpush1.msra.mxu0 0.0
    %411 = vmatprep.subr.mxu0 0.0
    %412 = vmatpush1.msra.mxu0 0.0
    %413 = vmatprep.mubr.f32.mxu0 0.0
    %414 = vmatmul.mubr.f32.gmra.mrb[0].mxu0 %v347
    %v415 = vpop.f32.mrb[0].mxu0
    %v416 = vadd.f32 0.0, %v415
    %v417 = vpop.f32.mrb[0].mxu0
    %v418 = vadd.f32 0.0, %v417
    %419 = vdwg.mxu0
    %420 = vmatprep.subr.mxu0 0.0
    %421 = vmatpush1.msra.mxu0 %v269
    %422 = vmatprep.subr.mxu0 0.0
    %423 = vmatpush1.msra.mxu0 0.0
    %424 = vmatprep.subr.mxu0 0.0
    %425 = vmatpush1.msra.mxu0 0.0
    %426 = vmatprep.subr.mxu0 0.0
    %427 = vmatpush1.msra.mxu0 0.0
    %428 = vmatprep.subr.mxu0 0.0
    %429 = vmatpush1.msra.mxu0 0.0
    %430 = vmatprep.subr.mxu0 0.0
    %431 = vmatpush1.msra.mxu0 0.0
    %432 = vmatprep.subr.mxu0 0.0
    %433 = vmatpush1.msra.mxu0 0.0
    %434 = vmatprep.subr.mxu0 0.0
    %435 = vmatpush1.msra.mxu0 0.0
    %436 = vmatprep.subr.mxu0 0.0
    %437 = vmatpush1.msra.mxu0 0.0
    %438 = vmatprep.subr.mxu0 0.0
    %439 = vmatpush1.msra.mxu0 0.0
    %440 = vmatprep.subr.mxu0 0.0
    %441 = vmatpush1.msra.mxu0 0.0
    %442 = vmatprep.subr.mxu0 0.0
    %443 = vmatpush1.msra.mxu0 0.0
    %444 = vmatprep.subr.mxu0 0.0
    %445 = vmatpush1.msra.mxu0 0.0
    %446 = vmatprep.subr.mxu0 0.0
    %447 = vmatpush1.msra.mxu0 0.0
    %448 = vmatprep.subr.mxu0 0.0
    %449 = vmatpush1.msra.mxu0 0.0
    %450 = vmatprep.subr.mxu0 0.0
    %451 = vmatpush1.msra.mxu0 0.0
    %452 = vmatprep.subr.mxu0 0.0
    %453 = vmatpush1.msra.mxu0 0.0
    %454 = vmatprep.subr.mxu0 0.0
    %455 = vmatpush1.msra.mxu0 0.0
    %456 = vmatprep.subr.mxu0 0.0
    %457 = vmatpush1.msra.mxu0 0.0
    %458 = vmatprep.subr.mxu0 0.0
    %459 = vmatpush1.msra.mxu0 0.0
    %460 = vmatprep.subr.mxu0 0.0
    %461 = vmatpush1.msra.mxu0 0.0
    %462 = vmatprep.subr.mxu0 0.0
    %463 = vmatpush1.msra.mxu0 0.0
    %464 = vmatprep.subr.mxu0 0.0
    %465 = vmatpush1.msra.mxu0 0.0
    %466 = vmatprep.subr.mxu0 0.0
    %467 = vmatpush1.msra.mxu0 0.0
    %468 = vmatprep.subr.mxu0 0.0
    %469 = vmatpush1.msra.mxu0 0.0
    %470 = vmatprep.subr.mxu0 0.0
    %471 = vmatpush1.msra.mxu0 0.0
    %472 = vmatprep.subr.mxu0 0.0
    %473 = vmatpush1.msra.mxu0 0.0
    %474 = vmatprep.subr.mxu0 0.0
    %475 = vmatpush1.msra.mxu0 0.0
    %476 = vmatprep.subr.mxu0 0.0
    %477 = vmatpush1.msra.mxu0 0.0
    %478 = vmatprep.subr.mxu0 0.0
    %479 = vmatpush1.msra.mxu0 0.0
    %480 = vmatprep.subr.mxu0 0.0
    %481 = vmatpush1.msra.mxu0 0.0
    %482 = vmatprep.subr.mxu0 0.0
    %483 = vmatpush1.msra.mxu0 0.0
    %484 = vmatprep.mubr.f32.mxu0 0.0
    %485 = vmatmul.mubr.f32.gmra.mrb[0].mxu0 %v347
    %v486 = vpop.f32.mrb[0].mxu0
    %v487 = vadd.f32 0.0, %v486
    %v488 = vpop.f32.mrb[0].mxu0
    %489 = vdwg.mxu0
    %v490 = vadd.f32 %v342, %v416
    %v491 = vadd.f32 %v342, %v418
    %v492 = vadd.f32 %v342, %v487
    %vm493 = vcmp.gt.f32.partialorder %v490, 0.0
    %vm494 = vcmp.gt.f32.partialorder %v491, 0.0
    %vm495 = vcmp.gt.f32.partialorder %v492, 0.0
    %v496 = vstv %s57
    %v497 = vmul.f32 %v496, %v490
    %v498 = vmul.f32 %v496, %v491
    %v499 = vmul.f32 %v496, %v492
    %v500 = vsel %vm493, %v490, %v497
    %v501 = vsel %vm494, %v491, %v498
    %v502 = vsel %vm495, %v492, %v499
    %v503 = vmax.f32 %v500, %v501
    %v504 = vmax.f32 %v503, %v502
    %v505 = vsub.f32 %v500, %v504
    %v506 = vmul.f32 %v505, 1.442695
    %v507 = vpow.pop %v506
    %v508 = vsub.f32 %v501, %v504
    %v509 = vmul.f32 %v508, 1.442695
    %v510 = vpow.pop %v509
    %v511 = vsub.f32 %v502, %v504
    %v512 = vmul.f32 %v511, 1.442695
    %v513 = vpow.pop %v512
    %v514 = vadd.f32 %v507, %v510
    %v515 = vadd.f32 %v514, %v513
    %v516 = vrcp.pop %v515
    %v517 = vmul.f32 %v507, %v516
    %v518 = vmul.f32 %v510, %v516
    %v519 = vmul.f32 %v513, %v516
    %v520 = vld [vmem:[%s7] sm:$0xff]
    %v522 = vsel %vm271, %v520, 0
    %524 = vmatprep.subr.mxu0 %v518
    %525 = vmatpush1.msra.mxu0 %v517
    %526 = vmatprep.subr.mxu0 0.0
    %527 = vmatpush1.msra.mxu0 0.0
    %528 = vmatprep.subr.mxu0 0.0
    %529 = vmatpush1.msra.mxu0 0.0
    %530 = vmatprep.subr.mxu0 0.0
    %531 = vmatpush1.msra.mxu0 0.0
    %532 = vmatprep.subr.mxu0 0.0
    %533 = vmatpush1.msra.mxu0 0.0
    %534 = vmatprep.subr.mxu0 0.0
    %535 = vmatpush1.msra.mxu0 0.0
    %536 = vmatprep.subr.mxu0 0.0
    %537 = vmatpush1.msra.mxu0 0.0
    %538 = vmatprep.subr.mxu0 0.0
    %539 = vmatpush1.msra.mxu0 0.0
    %540 = vmatprep.subr.mxu0 0.0
    %541 = vmatpush1.msra.mxu0 0.0
    %542 = vmatprep.subr.mxu0 0.0
    %543 = vmatpush1.msra.mxu0 0.0
    %544 = vmatprep.subr.mxu0 0.0
    %545 = vmatpush1.msra.mxu0 0.0
    %546 = vmatprep.subr.mxu0 0.0
    %547 = vmatpush1.msra.mxu0 0.0
    %548 = vmatprep.subr.mxu0 0.0
    %549 = vmatpush1.msra.mxu0 0.0
    %550 = vmatprep.subr.mxu0 0.0
    %551 = vmatpush1.msra.mxu0 0.0
    %552 = vmatprep.subr.mxu0 0.0
    %553 = vmatpush1.msra.mxu0 0.0
    %554 = vmatprep.subr.mxu0 0.0
    %555 = vmatpush1.msra.mxu0 0.0
    %556 = vmatprep.subr.mxu0 0.0
    %557 = vmatpush1.msra.mxu0 0.0
    %558 = vmatprep.subr.mxu0 0.0
    %559 = vmatpush1.msra.mxu0 0.0
    %560 = vmatprep.subr.mxu0 0.0
    %561 = vmatpush1.msra.mxu0 0.0
    %562 = vmatprep.subr.mxu0 0.0
    %563 = vmatpush1.msra.mxu0 0.0
    %564 = vmatprep.subr.mxu0 0.0
    %565 = vmatpush1.msra.mxu0 0.0
    %566 = vmatprep.subr.mxu0 0.0
    %567 = vmatpush1.msra.mxu0 0.0
    %568 = vmatprep.subr.mxu0 0.0
    %569 = vmatpush1.msra.mxu0 0.0
    %570 = vmatprep.subr.mxu0 0.0
    %571 = vmatpush1.msra.mxu0 0.0
    %572 = vmatprep.subr.mxu0 0.0
    %573 = vmatpush1.msra.mxu0 0.0
    %574 = vmatprep.subr.mxu0 0.0
    %575 = vmatpush1.msra.mxu0 0.0
    %576 = vmatprep.subr.mxu0 0.0
    %577 = vmatpush1.msra.mxu0 0.0
    %578 = vmatprep.subr.mxu0 0.0
    %579 = vmatpush1.msra.mxu0 0.0
    %580 = vmatprep.subr.mxu0 0.0
    %581 = vmatpush1.msra.mxu0 0.0
    %582 = vmatprep.subr.mxu0 0.0
    %583 = vmatpush1.msra.mxu0 0.0
    %584 = vmatprep.subr.mxu0 0.0
    %585 = vmatpush1.msra.mxu0 0.0
    %586 = vmatprep.subr.mxu0 0.0
    %587 = vmatpush1.msra.mxu0 0.0
    %588 = vmatprep.mubr.f32.mxu0 0.0
    %589 = vmatmul.mubr.f32.gmra.mrb[0].mxu0 %v522
    %v590 = vpop.f32.mrb[0].mxu0
    %v591 = vadd.f32 0.0, %v590
    %v592 = vpop.f32.mrb[0].mxu0
    %v593 = vadd.f32 0.0, %v592
    %594 = vdwg.mxu0
    %595 = vmatprep.subr.mxu0 0.0
    %596 = vmatpush1.msra.mxu0 %v519
    %597 = vmatprep.subr.mxu0 0.0
    %598 = vmatpush1.msra.mxu0 0.0
    %599 = vmatprep.subr.mxu0 0.0
    %600 = vmatpush1.msra.mxu0 0.0
    %601 = vmatprep.subr.mxu0 0.0
    %602 = vmatpush1.msra.mxu0 0.0
    %603 = vmatprep.subr.mxu0 0.0
    %604 = vmatpush1.msra.mxu0 0.0
    %605 = vmatprep.subr.mxu0 0.0
    %606 = vmatpush1.msra.mxu0 0.0
    %607 = vmatprep.subr.mxu0 0.0
    %608 = vmatpush1.msra.mxu0 0.0
    %609 = vmatprep.subr.mxu0 0.0
    %610 = vmatpush1.msra.mxu0 0.0
    %611 = vmatprep.subr.mxu0 0.0
    %612 = vmatpush1.msra.mxu0 0.0
    %613 = vmatprep.subr.mxu0 0.0
    %614 = vmatpush1.msra.mxu0 0.0
    %615 = vmatprep.subr.mxu0 0.0
    %616 = vmatpush1.msra.mxu0 0.0
    %617 = vmatprep.subr.mxu0 0.0
    %618 = vmatpush1.msra.mxu0 0.0
    %619 = vmatprep.subr.mxu0 0.0
    %620 = vmatpush1.msra.mxu0 0.0
    %621 = vmatprep.subr.mxu0 0.0
    %622 = vmatpush1.msra.mxu0 0.0
    %623 = vmatprep.subr.mxu0 0.0
    %624 = vmatpush1.msra.mxu0 0.0
    %625 = vmatprep.subr.mxu0 0.0
    %626 = vmatpush1.msra.mxu0 0.0
    %627 = vmatprep.subr.mxu0 0.0
    %628 = vmatpush1.msra.mxu0 0.0
    %629 = vmatprep.subr.mxu0 0.0
    %630 = vmatpush1.msra.mxu0 0.0
    %631 = vmatprep.subr.mxu0 0.0
    %632 = vmatpush1.msra.mxu0 0.0
    %633 = vmatprep.subr.mxu0 0.0
    %634 = vmatpush1.msra.mxu0 0.0
    %635 = vmatprep.subr.mxu0 0.0
    %636 = vmatpush1.msra.mxu0 0.0
    %637 = vmatprep.subr.mxu0 0.0
    %638 = vmatpush1.msra.mxu0 0.0
    %639 = vmatprep.subr.mxu0 0.0
    %640 = vmatpush1.msra.mxu0 0.0
    %641 = vmatprep.subr.mxu0 0.0
    %642 = vmatpush1.msra.mxu0 0.0
    %643 = vmatprep.subr.mxu0 0.0
    %644 = vmatpush1.msra.mxu0 0.0
    %645 = vmatprep.subr.mxu0 0.0
    %646 = vmatpush1.msra.mxu0 0.0
    %647 = vmatprep.subr.mxu0 0.0
    %648 = vmatpush1.msra.mxu0 0.0
    %649 = vmatprep.subr.mxu0 0.0
    %650 = vmatpush1.msra.mxu0 0.0
    %651 = vmatprep.subr.mxu0 0.0
    %652 = vmatpush1.msra.mxu0 0.0
    %653 = vmatprep.subr.mxu0 0.0
    %654 = vmatpush1.msra.mxu0 0.0
    %655 = vmatprep.subr.mxu0 0.0
    %656 = vmatpush1.msra.mxu0 0.0
    %657 = vmatprep.subr.mxu0 0.0
    %658 = vmatpush1.msra.mxu0 0.0
    %659 = vmatprep.mubr.f32.mxu0 0.0
    %660 = vmatmul.mubr.f32.gmra.mrb[0].mxu0 %v522
    %v661 = vpop.f32.mrb[0].mxu0
    %v662 = vadd.f32 0.0, %v661
    %v663 = vpop.f32.mrb[0].mxu0
    %664 = vdwg.mxu0
    %v665 = vmul.f32 %v267, %v591
    %v666 = vmul.f32 %v268, %v593
    %v667 = vmul.f32 %v269, %v662
    %v668 = vadd.f32 %v665, %v666
    %v669 = vadd.f32 %v668, %v667
    %v670 = vmul.f32 %v669, 0.33333334
    %v671 = vadd.f32 %v670, %v58
    %672 = vst [vmem:[%s8] sm:$0xff] %v671
    // Predicated region
    $region42: #{conv_temporal_spectral_forward.1} parent=1 // pred_check
      _
    $region43: #{conv_temporal_spectral_forward.1} parent=1 // pred_check_branch
      %674 = sbr.rel (0) target = $region45
    $region44: #{conv_temporal_spectral_forward.1} parent=1 // pred_region
      _
    $region45: #{conv_temporal_spectral_forward.1} parent=1 // pred_fallthru
      _
    // Predicated region
    $region46: #{conv_temporal_spectral_forward.1} parent=1 // pred_check
      _
    $region47: #{conv_temporal_spectral_forward.1} parent=1 // pred_check_branch
      %676 = sbr.rel (0) target = $region49
    $region48: #{conv_temporal_spectral_forward.1} parent=1 // pred_region
      _
    $region49: #{conv_temporal_spectral_forward.1} parent=1 // pred_fallthru
      _
    %677 = vsyncpa [#allocation3], 1
    %678 = vsyncpa [#allocation4], 1

</llo_original>
